<compile_context>
chip_gen: v7x
topology: tpu7x:2x2x1
jax: 0.10.0
libtpu: 0.0.40
codegen_flags: <defaults>
</compile_context>

<pallas_src>
import functools

import jax
import jax.numpy as jnp
from jax.experimental import pallas as pl
from jax.experimental.pallas import tpu as pltpu

LANES = 128
SUBLANES = 8
# (TARGET_BLOCK_ROWS, 128) f32 = 4 MiB per input tile; 2 inputs x 2 pipeline
# buffers = 16 MiB.  Accepted on all chips with vmem_limit_bytes below.
TARGET_BLOCK_ROWS = 8192
VMEM_LIMIT_BYTES = 40 * 1024 * 1024


def _bce_partial_kernel(x_ref, y_ref, o_ref, *, block_rows, rows_valid,
                        needs_mask):
    i = pl.program_id(0)  # reduction step ("arbitrary")

    # Output block is resident across the whole grid axis: init once,
    # accumulate directly into it (no scratch accumulator needed).
    @pl.when(i == 0)
    def _():
        o_ref[...] = jnp.zeros_like(o_ref)

    # astype is a no-op for f32 inputs; keeps bf16 inputs cheap in HBM while
    # computing in f32.
    x = x_ref[...].astype(jnp.float32)
    y = y_ref[...].astype(jnp.float32)

    # Numerically stable BCE-with-logits:
    #   loss = max(x, 0) - x*y + log(1 + exp(-|x|))
    loss = jnp.maximum(x, 0.0) - x * y + jnp.log1p(jnp.exp(-jnp.abs(x)))

    def accumulate(l):
        # (block_rows, 128) -> (block_rows//8, 8, 128); summing axis 0 is pure
        # vreg-wise VPU adds (no cross-lane work until the wrapper).
        o_ref[...] += jnp.sum(l.reshape(-1, SUBLANES, LANES), axis=0)

    if needs_mask:
        last = pl.num_programs(0) - 1

        @pl.when(i < last)
        def _():
            accumulate(loss)

        @pl.when(i == last)
        def _():
            # Only the last (ragged) block needs masking: rows at or past
            # rows_valid were never part of the input (padded DMA rows may
            # hold garbage) and are forced to 0 via a select.
            r = jax.lax.broadcasted_iota(jnp.int32, (block_rows, 1), 0)
            valid = (i * block_rows + r) < rows_valid
            accumulate(jnp.where(valid, loss, 0.0))
    else:
        accumulate(loss)


def _bce_elementwise(x, y):
    x = x.astype(jnp.float32)
    y = y.astype(jnp.float32)
    return jnp.maximum(x, 0.0) - x * y + jnp.log1p(jnp.exp(-jnp.abs(x)))


def bce_with_logits_mean(outputs, labels):
    """Equivalent of F.binary_cross_entropy_with_logits(outputs, labels)."""
    assert outputs.shape == labels.shape
    n = int(outputs.size)
    assert n > 0

    x = outputs.reshape(-1)
    y = labels.reshape(-1)

    rows_full = n // LANES
    n_main = rows_full * LANES

    total = jnp.zeros((), jnp.float32)

    if rows_full > 0:
        if n_main == n:
            # Free reshape of the contiguous buffer — no pad, no copy.
            xm = x.reshape(rows_full, LANES)
            ym = y.reshape(rows_full, LANES)
        else:
            xm = jax.lax.slice(x, (0,), (n_main,)).reshape(rows_full, LANES)
            ym = jax.lax.slice(y, (0,), (n_main,)).reshape(rows_full, LANES)

        # Block rows: as large as the target, but never (much) more than the
        # data; must be a multiple of 8 sublanes.
        rows_rounded = ((rows_full + SUBLANES - 1) // SUBLANES) * SUBLANES
        block_rows = min(TARGET_BLOCK_ROWS, rows_rounded)
        num_blocks = pl.cdiv(rows_full, block_rows)
        needs_mask = (num_blocks * block_rows != rows_full)

        kernel = functools.partial(
            _bce_partial_kernel,
            block_rows=block_rows,
            rows_valid=rows_full,
            needs_mask=needs_mask,
        )

        partial = pl.pallas_call(
            kernel,
            out_shape=jax.ShapeDtypeStruct((SUBLANES, LANES), jnp.float32),
            grid_spec=pltpu.PrefetchScalarGridSpec(
                num_scalar_prefetch=0,
                grid=(num_blocks,),
                in_specs=[
                    pl.BlockSpec((block_rows, LANES), lambda i: (i, 0)),
                    pl.BlockSpec((block_rows, LANES), lambda i: (i, 0)),
                ],
                out_specs=pl.BlockSpec((SUBLANES, LANES), lambda i: (0, 0)),
            ),
            compiler_params=pltpu.CompilerParams(
                dimension_semantics=("arbitrary",),
                vmem_limit_bytes=VMEM_LIMIT_BYTES,
            ),
        )(xm, ym)

        # Single cheap cross-lane reduction in the wrapper.
        total = total + jnp.sum(partial)

    if n_main != n:
        # <=127-element tail: plain jnp, no padded copy of the full inputs.
        xt = jax.lax.slice(x, (n_main,), (n,))
        yt = jax.lax.slice(y, (n_main,), (n,))
        total = total + jnp.sum(_bce_elementwise(xt, yt))

    return total / n


def _reference(outputs, labels):
    return jnp.mean(_bce_elementwise(outputs, labels))


if __name__ == "__main__":
    key = jax.random.PRNGKey(0)
    k1, k2, k3, k4 = jax.random.split(key, 4)

    # Logits and {0,1} labels, NCHW-shaped as a typical classifier output.
    outputs = jax.random.normal(k1, (2, 4, 16, 16), dtype=jnp.float32)
    labels = jax.random.bernoulli(k2, 0.5, (2, 4, 16, 16)).astype(jnp.float32)

    loss = jax.block_until_ready(bce_with_logits_mean(outputs, labels))
    ref = jax.block_until_ready(_reference(outputs, labels))
    assert jnp.allclose(loss, ref, rtol=1e-5, atol=1e-6), (loss, ref)

    # Ragged case: exercises the masked last block and the wrapper-side tail.
    outputs2 = jax.random.normal(k3, (2, 3, 7, 11), dtype=jnp.float32)
    labels2 = jax.random.bernoulli(k4, 0.5, (2, 3, 7, 11)).astype(jnp.float32)
    loss2 = jax.block_until_ready(bce_with_logits_mean(outputs2, labels2))
    ref2 = jax.block_until_ready(_reference(outputs2, labels2))
    assert jnp.allclose(loss2, ref2, rtol=1e-5, atol=1e-6), (loss2, ref2)

    print("KERNEL_OK")
</pallas_src>

<mosaic_0001>
module attributes {stable_mosaic.version = 11 : i64} {
  func.func @_bce_partial_kernel(%arg0: i32, %arg1: memref<16x128xf32, #tpu.memory_space<vmem>>, %arg2: memref<16x128xf32, #tpu.memory_space<vmem>>, %arg3: memref<8x128xf32, #tpu.memory_space<vmem>>) attributes {dimension_semantics = [#tpu.dimension_semantics<arbitrary>], iteration_bounds = array<i64: 1>, scalar_prefetch = 0 : i64, scratch_operands = 0 : i64, tpu.core_type = #tpu.core_type<tc>, window_params = [{transform_indices = @transform_0, window_bounds = array<i64: 16, 128>}, {transform_indices = @transform_1, window_bounds = array<i64: 16, 128>}, {pipeline_mode = #tpu.pipeline_mode<synchronous>, transform_indices = @transform_2, window_bounds = array<i64: 8, 128>}]} {
    %c0_i32 = arith.constant 0 : i32
    %0 = arith.cmpi eq, %arg0, %c0_i32 : i32
    %1 = arith.extui %0 : i1 to i32
    %c0_i32_0 = arith.constant 0 : i32
    %2 = arith.cmpi ne, %1, %c0_i32_0 : i32
    scf.if %2 {
      %cst_10 = arith.constant 0.000000e+00 : f32
      %20 = vector.broadcast %cst_10 : f32 to vector<8x128xf32>
      %c0_11 = arith.constant 0 : index
      %c0_12 = arith.constant 0 : index
      %21 = vector.load %arg3[%c0_11, %c0_12] : memref<8x128xf32, #tpu.memory_space<vmem>>, vector<8x128xf32>
      tpu.vector_store %arg3[%c0_11, %c0_12], %20 {strides = array<i32>} : memref<8x128xf32, #tpu.memory_space<vmem>>, vector<8x128xf32>,
    } else {
    }
    %c0 = arith.constant 0 : index
    %c0_1 = arith.constant 0 : index
    %3 = vector.load %arg1[%c0, %c0_1] : memref<16x128xf32, #tpu.memory_space<vmem>>, vector<16x128xf32>
    %c0_2 = arith.constant 0 : index
    %c0_3 = arith.constant 0 : index
    %4 = vector.load %arg2[%c0_2, %c0_3] : memref<16x128xf32, #tpu.memory_space<vmem>>, vector<16x128xf32>
    %cst = arith.constant 0.000000e+00 : f32
    %5 = vector.broadcast %cst : f32 to vector<16x128xf32>
    %6 = arith.maximumf %3, %5 : vector<16x128xf32>
    %7 = arith.mulf %3, %4 : vector<16x128xf32>
    %8 = arith.subf %6, %7 : vector<16x128xf32>
    %9 = math.absf %3 : vector<16x128xf32>
    %cst_4 = arith.constant 0.000000e+00 : f32
    %10 = vector.broadcast %cst_4 : f32 to vector<16x128xf32>
    %11 = arith.subf %10, %9 : vector<16x128xf32>
    %12 = math.exp %11 : vector<16x128xf32>
    %13 = math.log1p %12 : vector<16x128xf32>
    %14 = arith.addf %8, %13 : vector<16x128xf32>
    %c0_5 = arith.constant 0 : index
    %c0_6 = arith.constant 0 : index
    %15 = vector.load %arg3[%c0_5, %c0_6] : memref<8x128xf32, #tpu.memory_space<vmem>>, vector<8x128xf32>
    %16 = vector.shape_cast %14 : vector<16x128xf32> to vector<2x8x128xf32>
    %cst_7 = arith.constant dense<0.000000e+00> : vector<8x128xf32>
    %17 = vector.multi_reduction <add>, %16, %cst_7 [0] : vector<2x8x128xf32> to vector<8x128xf32>
    %18 = arith.addf %15, %17 : vector<8x128xf32>
    %c0_8 = arith.constant 0 : index
    %c0_9 = arith.constant 0 : index
    %19 = vector.load %arg3[%c0_8, %c0_9] : memref<8x128xf32, #tpu.memory_space<vmem>>, vector<8x128xf32>
    tpu.vector_store %arg3[%c0_8, %c0_9], %18 {strides = array<i32>} : memref<8x128xf32, #tpu.memory_space<vmem>>, vector<8x128xf32>,
    return
  }
  func.func @transform_0(%arg0: i32) -> (i32, i32) {
    %c0_i32 = arith.constant 0 : i32
    %c0_i32_0 = arith.constant 0 : i32
    return %arg0, %c0_i32 : i32, i32
  }
  func.func @transform_1(%arg0: i32) -> (i32, i32) {
    %c0_i32 = arith.constant 0 : i32
    %c0_i32_0 = arith.constant 0 : i32
    return %arg0, %c0_i32 : i32, i32
  }
  func.func @transform_2(%arg0: i32) -> (i32, i32) {
    %c0_i32 = arith.constant 0 : i32
    %c0_i32_0 = arith.constant 0 : i32
    %c0_i32_1 = arith.constant 0 : i32
    return %c0_i32, %c0_i32_0 : i32, i32
  }
}

</mosaic_0001>

<llo_original>
// kernel: tpu_custom_call.1
$region0: #{tpu_custom_call.1}
  #allocation0 [shape = 'u32[]', space=smem, size = 0x4, offset = 0x4, fixed_abs, tag = 'smem constant byte address 0x4 - core index']
  #allocation1 [shape = 'u32[144,128]{1,0:T(1,128)}', space=vmem, size = 0x12000, scoped, tag = 'internal scratch']
  %s0 = inlined_call_operand.hbm [shape: f32[16,128], index: 0, kind: input, shape index: {}]
  %s1 = inlined_call_operand.hbm [shape: f32[16,128], index: 1, kind: input, shape index: {}]
  %s2 = inlined_call_operand.hbm [shape: f32[8,128], index: 2, kind: output, shape index: {}]
  %s3 = sld [smem:[#allocation0]]
  $region30: #{tpu_custom_call.1} parent=0
    _
  %s5 = ssub.s32 1, %s3
  %s6 = scalar_select 0, %s5, %s3
  $region1: #{tpu_custom_call.1} parent=0
    #allocation2 [shape = 'u8[8192]{0}', space=vmem, size = 0x2000, scoped, tag = 'input window, operand 0, single buffered']
    #allocation3 [shape = 's32[1]{0}', space=sflag, size = 0x4, scoped, tag = 'scoped memory for tpu_custom_call.1']
    #allocation4 [shape = 's32[1]{0}', space=sflag, size = 0x4, scoped, tag = 'scoped memory for tpu_custom_call.1']
    #allocation5 [shape = 'u8[8192]{0}', space=vmem, size = 0x2000, scoped, tag = 'input window, operand 1, single buffered']
    #allocation6 [shape = 's32[1]{0}', space=sflag, size = 0x4, scoped, tag = 'scoped memory for tpu_custom_call.1']
    #allocation7 [shape = 'u8[4096]{0}', space=vmem, size = 0x1000, scoped, tag = 'output window, operand 0, single buffered']
    %7 = vsyncpa [#allocation3], 0
    %8 = vsyncpa [#allocation6], 0
    %9 = vsyncpa [#allocation4], 0
    // Predicated region
    $region2: #{tpu_custom_call.1} parent=1 // pred_check
      _
    $region3: #{tpu_custom_call.1} parent=1 // pred_check_branch
      %11 = sbr.rel (0) target = $region5
    $region4: #{tpu_custom_call.1} parent=1 // pred_region
      %s13 = ssub.s32 256, 256
      %14 = vsyncadd [#allocation3], %s13
      %s15 = sshll.u32 [#allocation2], 4
      %s16 = int_to_ptr.vmem [resolvable:$true] %s15
      %21 = dma.hbm_to_vmem [thread:$0]  %s0, 256, %s16, [#allocation3], 128, 128, 8
    $region5: #{tpu_custom_call.1} parent=1 // pred_fallthru
      _
    // Predicated region
    $region6: #{tpu_custom_call.1} parent=1 // pred_check
      _
    $region7: #{tpu_custom_call.1} parent=1 // pred_check_branch
      %23 = sbr.rel (0) target = $region9
    $region8: #{tpu_custom_call.1} parent=1 // pred_region
      %s25 = ssub.s32 256, 256
      %26 = vsyncadd [#allocation6], %s25
      %s27 = sshll.u32 [#allocation5], 4
      %s28 = int_to_ptr.vmem [resolvable:$true] %s27
      %33 = dma.hbm_to_vmem [thread:$0]  %s1, 256, %s28, [#allocation6], 128, 128, 8
    $region9: #{tpu_custom_call.1} parent=1 // pred_fallthru
      _
    // Predicated region
    $region10: #{tpu_custom_call.1} parent=1 // pred_check
      _
    $region11: #{tpu_custom_call.1} parent=1 // pred_check_branch
      %35 = sbr.rel (0) target = $region13
    $region12: #{tpu_custom_call.1} parent=1 // pred_region
      %36 = dma.done [#allocation3], 256
    $region13: #{tpu_custom_call.1} parent=1 // pred_fallthru
      _
    // Predicated region
    $region14: #{tpu_custom_call.1} parent=1 // pred_check
      _
    $region15: #{tpu_custom_call.1} parent=1 // pred_check_branch
      %38 = sbr.rel (0) target = $region17
    $region16: #{tpu_custom_call.1} parent=1 // pred_region
      %39 = dma.done [#allocation6], 256
    $region17: #{tpu_custom_call.1} parent=1 // pred_fallthru
      _
    %p40 = scmp.eq.s32.totalorder 0, 0
    // Predicated region
    $region18: #{tpu_custom_call.1} parent=1 // pred_check
      %p41 = pneg %p40
    $region19: #{tpu_custom_call.1} parent=1 // pred_check_branch
      %43 = sbr.rel (%p41) target = $region21
    $region20: #{tpu_custom_call.1} parent=1 // pred_region
      %44 = vst [vmem:[#allocation7] sm:$0xff] 0.0
    $region21: #{tpu_custom_call.1} parent=1 // pred_fallthru
      _
    %v45 = vld [vmem:[#allocation2] sm:$0xff]
    %v46 = vld [vmem:[#allocation2 + $0x8] sm:$0xff]
    %v47 = vld [vmem:[#allocation5] sm:$0xff]
    %v48 = vld [vmem:[#allocation5 + $0x8] sm:$0xff]
    %v49 = vmax.f32 %v45, 0.0
    %v50 = vmax.f32 %v46, 0.0
    %v51 = vmul.f32 %v45, %v47
    %v52 = vmul.f32 %v46, %v48
    %v53 = vsub.f32 %v49, %v51
    %v54 = vsub.f32 %v50, %v52
    %v55 = vand.u32 2147483647, %v45
    %v56 = vand.u32 2147483647, %v46
    %v57 = vsub.f32 0.0, %v55
    %v58 = vsub.f32 0.0, %v56
    %v59 = vmul.f32 %v57, 1.442695
    %v60 = vpow.pop %v59
    %v61 = vmul.f32 %v58, 1.442695
    %v62 = vpow.pop %v61
    %v63 = vadd.f32 %v60, 1.0
    %v64 = vlog2.pop %v63
    %v65 = vmul.f32 %v64, 0.6931472
    %v66 = vmul.f32 -0.5, %v60
    %v67 = vadd.f32 %v66, 1.0
    %v68 = vmul.f32 %v67, %v60
    %v69 = vand.u32 2147483647, %v60
    %vm70 = vcmp.lt.f32.partialorder %v69, 0.0004427343
    %v71 = vsel %vm70, %v68, %v65
    %v72 = vadd.f32 %v62, 1.0
    %v73 = vlog2.pop %v72
    %v74 = vmul.f32 %v73, 0.6931472
    %v75 = vmul.f32 -0.5, %v62
    %v76 = vadd.f32 %v75, 1.0
    %v77 = vmul.f32 %v76, %v62
    %v78 = vand.u32 2147483647, %v62
    %vm79 = vcmp.lt.f32.partialorder %v78, 0.0004427343
    %v80 = vsel %vm79, %v77, %v74
    %v81 = vadd.f32 %v53, %v71
    %v82 = vadd.f32 %v54, %v80
    %v83 = vld [vmem:[#allocation7] sm:$0xff]
    %v84 = vadd.f32 %v81, %v82
    %v85 = vadd.f32 %v83, %v84
    %86 = vst [vmem:[#allocation7] sm:$0xff] %v85
    // Predicated region
    $region22: #{tpu_custom_call.1} parent=1 // pred_check
      _
    $region23: #{tpu_custom_call.1} parent=1 // pred_check_branch
      %88 = sbr.rel (0) target = $region25
    $region24: #{tpu_custom_call.1} parent=1 // pred_region
      %s90 = ssub.s32 128, 128
      %91 = vsyncadd [#allocation4], %s90
      %s93 = sshll.u32 [#allocation7], 4
      %s94 = int_to_ptr.vmem [resolvable:$true] %s93
      %96 = dma.vmem_to_hbm [thread:$0]  %s94, 128, %s2, [#allocation4]
    $region25: #{tpu_custom_call.1} parent=1 // pred_fallthru
      _
    // Predicated region
    $region26: #{tpu_custom_call.1} parent=1 // pred_check
      _
    $region27: #{tpu_custom_call.1} parent=1 // pred_check_branch
      %98 = sbr.rel (0) target = $region29
    $region28: #{tpu_custom_call.1} parent=1 // pred_region
      %99 = dma.done [#allocation4], 128
    $region29: #{tpu_custom_call.1} parent=1 // pred_fallthru
      _
    %100 = vsyncpa [#allocation3], 1
    %101 = vsyncpa [#allocation6], 1
    %102 = vsyncpa [#allocation4], 1

</llo_original>
